<compile_context>
chip_gen: v6e
topology: v6e:2x2x1
jax: 0.10.0
libtpu: 0.0.40
codegen_flags: <defaults>
</compile_context>

<pallas_src>
import functools

import jax
import jax.numpy as jnp
from jax.experimental import pallas as pl
from jax.experimental.pallas import tpu as pltpu


_TARGET_BLOCK_BYTES = 4 * 1024 * 1024  # ~4 MiB of logits per grid step


def _round_up(x, m):
    return (x + m - 1) // m * m


def _pow_int_or_float(q, gamma):
    """q ** gamma, with small-integer gamma specialized to VPU multiplies.

    q is assumed >= 0 (clamped by the caller), so the float fallback
    (exp(gamma*log(q)) on the EUP) cannot produce NaN.
    """
    g = float(gamma)
    if g == int(g) and 0 <= int(g) <= 8:
        e = int(g)
        result = None
        base = q
        while e > 0:
            if e & 1:
                result = base if result is None else result * base
            e >>= 1
            if e:
                base = base * base
        return jnp.ones_like(q) if result is None else result
    return jnp.power(q, g)


def _focal_loss_kernel(logits_ref, target_ref, out_ref, *, gamma, n_rows,
                       block_rows, neg_inv_n, need_mask):
    x = logits_ref[...]                                    # (TM, C) native dtype
    tgt = target_ref[...]                                  # (TM, 1) int32
    tm, c = x.shape

    # Row-wise max and one-hot gather of the target-class logit, kept in the
    # native input dtype (bf16 VPU on v6e/v7x).  The one-hot sum is exact:
    # a single nonzero plus zeros.
    m_nat = jnp.max(x, axis=-1, keepdims=True)             # (TM, 1)
    col_ids = jax.lax.broadcasted_iota(jnp.int32, (tm, c), 1)
    onehot = col_ids == tgt                                # (TM, C) bool
    x_t_nat = jnp.sum(jnp.where(onehot, x, jnp.zeros_like(x)),
                      axis=-1, keepdims=True)              # (TM, 1)

    # Single exp pass over the (TM, C) tile; accumulation and log in f32.
    m = m_nat.astype(jnp.float32)
    s = jnp.sum(jnp.exp(x.astype(jnp.float32) - m),
                axis=-1, keepdims=True)                    # (TM, 1) f32

    # Focal modulation only on the (TM, 1) picked values.
    logp_t = x_t_nat.astype(jnp.float32) - m - jnp.log(s)  # log softmax @ target
    p_t = jnp.exp(logp_t)
    q = jnp.maximum(1.0 - p_t, 0.0)                        # clamp fp round-off
    focal_t = _pow_int_or_float(q, gamma) * logp_t         # (TM, 1)

    if need_mask:
        # Partial trailing tile: padded rows hold garbage logits, but all row
        # math is per-row and select does not propagate NaN/inf from the
        # unselected branch on TPU, so masking the (TM,1) result suffices.
        row_ids = (jax.lax.broadcasted_iota(jnp.int32, (tm, 1), 0)
                   + pl.program_id(0) * block_rows)
        focal_t = jnp.where(row_ids < n_rows, focal_t, 0.0)

    # weight=None, reduction='mean'  ->  per-tile partial of  -sum / N.
    out_ref[...] = jnp.sum(focal_t, axis=0, keepdims=True)[None] * neg_inv_n


def focal_loss(logits, targets, gamma=2.0, block_rows=None):
    """Focal loss, mean reduction, no class weights.

    logits: (N, C) float array; targets: (N,) integer class ids.
    Returns a scalar float32 loss.
    """
    n, c = logits.shape
    targets2d = targets.astype(jnp.int32).reshape(n, 1)

    itemsize = jnp.dtype(logits.dtype).itemsize
    sub = max(8, 32 // itemsize)          # sublane multiple: 8 f32 / 16 bf16 / 32 i8

    # Device VMEM capacity (64 MiB per TC on v7x, 128 MiB on v5e/v6e); budget
    # roughly half of it for this kernel's working set.
    try:
        vmem_cap = int(pltpu.get_tpu_info().vmem_capacity_bytes)
    except Exception:
        vmem_cap = 64 * 1024 * 1024       # conservative (v7x) fallback
    vmem_budget = vmem_cap // 2

    # Row tile from a byte budget, shrunk if the modelled working set
    # (double-buffered native-dtype input + ~3 f32-sized temps per tile)
    # would not fit the VMEM budget.
    if block_rows is None:
        tm = _TARGET_BLOCK_BYTES // max(c * itemsize, 1)
    else:
        tm = int(block_rows)
    per_row_bytes = c * (2 * itemsize + 3 * 4)
    tm = min(tm, max(vmem_budget // per_row_bytes, sub))
    tm = max(tm // sub * sub, sub)
    tm = min(tm, _round_up(n, sub))

    num_tiles = -(-n // tm)
    vmem_limit = int(min(vmem_cap - (16 << 20),
                         max(32 << 20, per_row_bytes * tm + (4 << 20))))

    kernel = functools.partial(
        _focal_loss_kernel,
        gamma=float(gamma),
        n_rows=n,
        block_rows=tm,
        neg_inv_n=-1.0 / float(n),
        need_mask=(n % tm != 0),
    )

    partial_sums = pl.pallas_call(
        kernel,
        out_shape=jax.ShapeDtypeStruct((num_tiles, 1, 1), jnp.float32),
        grid_spec=pltpu.PrefetchScalarGridSpec(
            num_scalar_prefetch=0,
            grid=(num_tiles,),
            in_specs=[
                pl.BlockSpec((tm, c), lambda i: (i, 0)),
                pl.BlockSpec((tm, 1), lambda i: (i, 0)),
            ],
            out_specs=pl.BlockSpec((1, 1, 1), lambda i: (i, 0, 0)),
        ),
        compiler_params=pltpu.CompilerParams(
            dimension_semantics=("parallel",),   # per-tile outputs -> megacore OK
            vmem_limit_bytes=vmem_limit,
        ),
    )(logits, targets2d)
    return jnp.sum(partial_sums)


def _focal_loss_ref(logits, targets, gamma=2.0):
    log_prob = jax.nn.log_softmax(logits.astype(jnp.float32), axis=-1)
    prob = jnp.exp(log_prob)
    focal = (1.0 - prob) ** gamma * log_prob
    picked = jnp.take_along_axis(focal, targets[:, None], axis=-1)[:, 0]
    return -jnp.mean(picked)


if __name__ == "__main__":
    key = jax.random.PRNGKey(0)
    k1, k2, k3 = jax.random.split(key, 3)

    # Case 1: N deliberately not a multiple of the row tile -> multi-tile
    # parallel partial sums + masked trailing tile.
    N, C = 20, 16
    logits = jax.random.normal(k1, (N, C), dtype=jnp.float32)
    targets = jax.random.randint(k2, (N,), 0, C, dtype=jnp.int32)
    ref = _focal_loss_ref(logits, targets, gamma=2.0)

    loss_tiled = focal_loss(logits, targets, gamma=2.0, block_rows=8)
    jax.block_until_ready(loss_tiled)
    assert jnp.allclose(loss_tiled, ref, atol=1e-5, rtol=1e-5), (loss_tiled, ref)

    # Case 2: default (budget-derived) tile -> single tile, still masked.
    loss_auto = focal_loss(logits, targets, gamma=2.0)
    jax.block_until_ready(loss_auto)
    assert jnp.allclose(loss_auto, ref, atol=1e-5, rtol=1e-5), (loss_auto, ref)

    # Case 3: N a multiple of the tile -> mask-free code path, 4 parallel tiles.
    N2 = 64
    logits2 = jax.random.normal(k3, (N2, C), dtype=jnp.float32)
    targets2 = jax.random.randint(k2, (N2,), 0, C, dtype=jnp.int32)
    loss2 = focal_loss(logits2, targets2, gamma=2.0, block_rows=16)
    jax.block_until_ready(loss2)
    ref2 = _focal_loss_ref(logits2, targets2, gamma=2.0)
    assert jnp.allclose(loss2, ref2, atol=1e-5, rtol=1e-5), (loss2, ref2)

    # Case 4: bf16 logits -> native-dtype max / one-hot gather path.
    logits_bf16 = logits.astype(jnp.bfloat16)
    loss_bf16 = focal_loss(logits_bf16, targets, gamma=2.0)
    jax.block_until_ready(loss_bf16)
    ref_bf16 = _focal_loss_ref(logits_bf16.astype(jnp.float32), targets, gamma=2.0)
    assert jnp.allclose(loss_bf16, ref_bf16, atol=3e-2, rtol=3e-2), (loss_bf16, ref_bf16)

    print("KERNEL_OK")
</pallas_src>

<mosaic_0001>
module attributes {stable_mosaic.version = 11 : i64} {
  func.func @_focal_loss_kernel(%arg0: i32, %arg1: memref<8x16xf32, #tpu.memory_space<vmem>>, %arg2: memref<8x1xi32, #tpu.memory_space<vmem>>, %arg3: memref<1x1x1xf32, #tpu.memory_space<vmem>>) attributes {dimension_semantics = [#tpu.dimension_semantics<parallel>], iteration_bounds = array<i64: 3>, scalar_prefetch = 0 : i64, scratch_operands = 0 : i64, tpu.core_type = #tpu.core_type<tc>, window_params = [{transform_indices = @transform_0, window_bounds = array<i64: 8, 16>}, {transform_indices = @transform_1, window_bounds = array<i64: 8, 1>}, {transform_indices = @transform_2, window_bounds = array<i64: 1, 1, 1>}]} {
    %c0 = arith.constant 0 : index
    %c0_0 = arith.constant 0 : index
    %0 = vector.load %arg1[%c0, %c0_0] : memref<8x16xf32, #tpu.memory_space<vmem>>, vector<8x16xf32>
    %c0_1 = arith.constant 0 : index
    %c0_2 = arith.constant 0 : index
    %1 = vector.load %arg2[%c0_1, %c0_2] : memref<8x1xi32, #tpu.memory_space<vmem>>, vector<8x1xi32>
    %cst = arith.constant dense<0xFF800000> : vector<8xf32>
    %2 = vector.multi_reduction <maximumf>, %0, %cst [1] : vector<8x16xf32> to vector<8xf32>
    %3 = vector.shape_cast %2 : vector<8xf32> to vector<8x1xf32>
    %4 = tpu.iota {dimensions = array<i32: 1>} : vector<8x16xi32>
    %5 = vector.broadcast %1 : vector<8x1xi32> to vector<8x16xi32>
    %6 = arith.cmpi eq, %4, %5 : vector<8x16xi32>
    %cst_3 = arith.constant 0.000000e+00 : f32
    %7 = vector.broadcast %cst_3 : f32 to vector<8x16xf32>
    %8 = arith.select %6, %0, %7 : vector<8x16xi1>, vector<8x16xf32>
    %cst_4 = arith.constant dense<0.000000e+00> : vector<8xf32>
    %9 = vector.multi_reduction <add>, %8, %cst_4 [1] : vector<8x16xf32> to vector<8xf32>
    %10 = vector.shape_cast %9 : vector<8xf32> to vector<8x1xf32>
    %11 = vector.broadcast %3 : vector<8x1xf32> to vector<8x16xf32>
    %12 = arith.subf %0, %11 : vector<8x16xf32>
    %13 = math.exp %12 : vector<8x16xf32>
    %cst_5 = arith.constant dense<0.000000e+00> : vector<8xf32>
    %14 = vector.multi_reduction <add>, %13, %cst_5 [1] : vector<8x16xf32> to vector<8xf32>
    %15 = vector.shape_cast %14 : vector<8xf32> to vector<8x1xf32>
    %16 = arith.subf %10, %3 : vector<8x1xf32>
    %17 = math.log %15 : vector<8x1xf32>
    %18 = arith.subf %16, %17 : vector<8x1xf32>
    %19 = math.exp %18 : vector<8x1xf32>
    %cst_6 = arith.constant 1.000000e+00 : f32
    %20 = vector.broadcast %cst_6 : f32 to vector<8x1xf32>
    %21 = arith.subf %20, %19 : vector<8x1xf32>
    %cst_7 = arith.constant 0.000000e+00 : f32
    %22 = vector.broadcast %cst_7 : f32 to vector<8x1xf32>
    %23 = arith.maximumf %21, %22 : vector<8x1xf32>
    %24 = arith.mulf %23, %23 : vector<8x1xf32>
    %25 = arith.mulf %24, %18 : vector<8x1xf32>
    %26 = tpu.iota {dimensions = array<i32: 0>} : vector<8x1xi32>
    %c8_i32 = arith.constant 8 : i32
    %27 = arith.muli %arg0, %c8_i32 : i32
    %28 = vector.broadcast %27 : i32 to vector<8x1xi32>
    %29 = arith.addi %26, %28 : vector<8x1xi32>
    %c20_i32 = arith.constant 20 : i32
    %30 = vector.broadcast %c20_i32 : i32 to vector<8x1xi32>
    %31 = arith.cmpi slt, %29, %30 : vector<8x1xi32>
    %cst_8 = arith.constant 0.000000e+00 : f32
    %32 = vector.broadcast %cst_8 : f32 to vector<8x1xf32>
    %33 = arith.select %31, %25, %32 : vector<8x1xi1>, vector<8x1xf32>
    %cst_9 = arith.constant dense<0.000000e+00> : vector<1xf32>
    %34 = vector.multi_reduction <add>, %33, %cst_9 [0] : vector<8x1xf32> to vector<1xf32>
    %35 = vector.shape_cast %34 : vector<1xf32> to vector<1x1xf32>
    %36 = vector.shape_cast %35 : vector<1x1xf32> to vector<1x1x1xf32>
    %cst_10 = arith.constant -5.000000e-02 : f32
    %37 = vector.broadcast %cst_10 : f32 to vector<1x1x1xf32>
    %38 = arith.mulf %36, %37 : vector<1x1x1xf32>
    %c0_11 = arith.constant 0 : index
    %c0_12 = arith.constant 0 : index
    %c0_13 = arith.constant 0 : index
    %39 = vector.load %arg3[%c0_11, %c0_12, %c0_13] : memref<1x1x1xf32, #tpu.memory_space<vmem>>, vector<1x1x1xf32>
    tpu.vector_store %arg3[%c0_11, %c0_12, %c0_13], %38 {strides = array<i32>} : memref<1x1x1xf32, #tpu.memory_space<vmem>>, vector<1x1x1xf32>,
    return
  }
  func.func @transform_0(%arg0: i32) -> (i32, i32) {
    %c0_i32 = arith.constant 0 : i32
    %c0_i32_0 = arith.constant 0 : i32
    return %arg0, %c0_i32 : i32, i32
  }
  func.func @transform_1(%arg0: i32) -> (i32, i32) {
    %c0_i32 = arith.constant 0 : i32
    %c0_i32_0 = arith.constant 0 : i32
    return %arg0, %c0_i32 : i32, i32
  }
  func.func @transform_2(%arg0: i32) -> (i32, i32, i32) {
    %c0_i32 = arith.constant 0 : i32
    %c0_i32_0 = arith.constant 0 : i32
    %c0_i32_1 = arith.constant 0 : i32
    return %arg0, %c0_i32, %c0_i32_0 : i32, i32, i32
  }
}

</mosaic_0001>

<llo_original>
// kernel: tpu_custom_call.1
$region0: #{tpu_custom_call.1}
  #allocation0 [shape = 'u32[]', space=smem, size = 0x4, offset = 0x4, fixed_abs, tag = 'smem constant byte address 0x4 - core index']
  #allocation1 [shape = 'u32[144,128]{1,0:T(1,128)}', space=vmem, size = 0x12000, scoped, tag = 'internal scratch']
  %s0 = inlined_call_operand.vmem [shape: f32[20,16], index: 0, kind: input, shape index: {}]
  %s1 = inlined_call_operand.vmem [shape: s32[20,1], index: 1, kind: input, shape index: {}]
  %s2 = inlined_call_operand.vmem [shape: f32[3,1,1], index: 2, kind: output, shape index: {}]
  %s3 = sld [smem:[#allocation0]]
  $region41: #{tpu_custom_call.1} parent=0
    _
  %s5 = ssub.s32 1, %s3
  %s6 = scalar_select 0, %s5, %s3
  loop: start=0, step=1, limit=5
  $region2: #{tpu_custom_call.1} parent=0 // loop_pre_header
    _
  $region3: #{tpu_custom_call.1} parent=0 // loop_header
    %s8 = sphi 0, %s12
    %p9 = scmp.ge.s32.totalorder %s8, 5
    %s18 = sphi 0, %s20
    %s21 = sphi 0, %s18
    %s22 = sphi 0, %s21
    %s38 = sphi 0, %s22
    %s44 = sphi 0, %s46
    %s47 = sphi 0, %s44
    %s48 = sphi 0, %s47
    %s64 = sphi 0, %s48
    %s70 = sphi 0, %s72
    %s73 = sphi 0, %s70
    %s74 = sphi 0, %s73
    %s90 = sphi 0, %s74
  $region4: #{tpu_custom_call.1} parent=0 // loop_header_branch
    %11 = sbr.rel (%p9) target = $region8
  $region5: #{tpu_custom_call.1} parent=0 // loop_body
    %s13 = ssub.s32 %s8, 1
    %s14 = ssub.s32 %s8, 2
    %s15 = sadd.s32 %s8, 1
    %s16 = ssub.s32 %s8, %s15
    %p17 = scmp.eq.s32.totalorder %s16, 0
    %s19 = sadd.s32 %s18, 1
    %s20 = scalar_select %p17, %s18, %s19
    %p23 = pneg %p17
    %p24 = scmp.eq.s32.totalorder %s8, 2
    %p25 = por %p23, %p24
    %p26 = scmp.ne.s32.totalorder %s18, %s21
    %p27 = scmp.eq.s32.totalorder %s8, 0
    %p28 = por %p26, %p27
    %p29 = scmp.ne.s32.totalorder %s18, %s21
    %p30 = scmp.eq.s32.totalorder %s13, 2
    %p31 = por %p29, %p30
    %p32 = scmp.ne.s32.totalorder %s21, %s22
    %p33 = scmp.eq.s32.totalorder %s13, 0
    %p34 = por %p32, %p33
    %p35 = scmp.ne.s32.totalorder %s21, %s22
    %p36 = scmp.eq.s32.totalorder %s14, 2
    %p37 = por %p35, %p36
    %p39 = scmp.ne.s32.totalorder %s22, %s38
    %p40 = scmp.eq.s32.totalorder %s14, 0
    %p41 = por %p39, %p40
    %s42 = ssub.s32 %s8, %s15
    %p43 = scmp.eq.s32.totalorder %s42, 0
    %s45 = sadd.s32 %s44, 1
    %s46 = scalar_select %p43, %s44, %s45
    %p49 = pneg %p43
    %p50 = scmp.eq.s32.totalorder %s8, 2
    %p51 = por %p49, %p50
    %p52 = scmp.ne.s32.totalorder %s44, %s47
    %p53 = scmp.eq.s32.totalorder %s8, 0
    %p54 = por %p52, %p53
    %p55 = scmp.ne.s32.totalorder %s44, %s47
    %p56 = scmp.eq.s32.totalorder %s13, 2
    %p57 = por %p55, %p56
    %p58 = scmp.ne.s32.totalorder %s47, %s48
    %p59 = scmp.eq.s32.totalorder %s13, 0
    %p60 = por %p58, %p59
    %p61 = scmp.ne.s32.totalorder %s47, %s48
    %p62 = scmp.eq.s32.totalorder %s14, 2
    %p63 = por %p61, %p62
    %p65 = scmp.ne.s32.totalorder %s48, %s64
    %p66 = scmp.eq.s32.totalorder %s14, 0
    %p67 = por %p65, %p66
    %s68 = ssub.s32 %s8, %s15
    %p69 = scmp.eq.s32.totalorder %s68, 0
    %s71 = sadd.s32 %s70, 1
    %s72 = scalar_select %p69, %s70, %s71
    %p75 = pneg %p69
    %p76 = scmp.eq.s32.totalorder %s8, 2
    %p77 = por %p75, %p76
    %p78 = scmp.ne.s32.totalorder %s70, %s73
    %p79 = scmp.eq.s32.totalorder %s8, 0
    %p80 = por %p78, %p79
    %p81 = scmp.ne.s32.totalorder %s70, %s73
    %p82 = scmp.eq.s32.totalorder %s13, 2
    %p83 = por %p81, %p82
    %p84 = scmp.ne.s32.totalorder %s73, %s74
    %p85 = scmp.eq.s32.totalorder %s13, 0
    %p86 = por %p84, %p85
    %p87 = scmp.ne.s32.totalorder %s73, %s74
    %p88 = scmp.eq.s32.totalorder %s14, 2
    %p89 = por %p87, %p88
    %p91 = scmp.ne.s32.totalorder %s74, %s90
    %p92 = scmp.eq.s32.totalorder %s14, 0
    %p93 = por %p91, %p92
    %p94 = scmp.le.s32.totalorder 1, %s8
    %p95 = scmp.lt.s32.totalorder %s8, 4
    %p96 = pnand %p94, %p95
    %p97 = pneg %p96
    // Predicated region
    $region9: #{tpu_custom_call.1} parent=5 // pred_check
      _
    $region10: #{tpu_custom_call.1} parent=5 // pred_check_branch
      %99 = sbr.rel (%p96) target = $region12
    $region11: #{tpu_custom_call.1} parent=5 // pred_region
      %s100 = ssub.s32 %s8, 1
    $region12: #{tpu_custom_call.1} parent=5 // pred_fallthru
      _
    %p101 = scmp.lt.s32.totalorder %s8, 3
    // Predicated region
    $region13: #{tpu_custom_call.1} parent=5 // pred_check
      %p102 = pneg %p101
    $region14: #{tpu_custom_call.1} parent=5 // pred_check_branch
      %104 = sbr.rel (%p102) target = $region16
    $region15: #{tpu_custom_call.1} parent=5 // pred_region
      // Predicated region
      $region17: #{tpu_custom_call.1} parent=15 // pred_check
        %p105 = pneg %p28
      $region18: #{tpu_custom_call.1} parent=15 // pred_check_branch
        %107 = sbr.rel (%p105) target = $region20
      $region19: #{tpu_custom_call.1} parent=15 // pred_region
        %p108 = scmp.lt.s32.totalorder %s8, 2
        %s109 = scalar_select %p108, %s8, 2
        %s110 = smul.addr %s109, 8
        %s111 = scalar_lea.vmem %s0, %s110
      $region20: #{tpu_custom_call.1} parent=15 // pred_fallthru
        _
      // Predicated region
      $region21: #{tpu_custom_call.1} parent=15 // pred_check
        %p112 = pneg %p54
      $region22: #{tpu_custom_call.1} parent=15 // pred_check_branch
        %114 = sbr.rel (%p112) target = $region24
      $region23: #{tpu_custom_call.1} parent=15 // pred_region
        %p115 = scmp.lt.s32.totalorder %s8, 2
        %s116 = scalar_select %p115, %s8, 2
        %s117 = smul.addr %s116, 8
        %s118 = scalar_lea.vmem %s1, %s117
      $region24: #{tpu_custom_call.1} parent=15 // pred_fallthru
        _
    $region16: #{tpu_custom_call.1} parent=5 // pred_fallthru
      _
    %p119 = scmp.le.s32.totalorder 1, %s8
    %p120 = scmp.lt.s32.totalorder %s8, 4
    %p121 = pnand %p119, %p120
    %p122 = pneg %p121
    // Predicated region
    $region25: #{tpu_custom_call.1} parent=5 // pred_check
      _
    $region26: #{tpu_custom_call.1} parent=5 // pred_check_branch
      %124 = sbr.rel (%p121) target = $region28
    $region27: #{tpu_custom_call.1} parent=5 // pred_region
      %s125 = ssub.s32 %s8, 1
      %p126 = scmp.lt.s32.totalorder %s13, 2
      %s127 = scalar_select %p126, %s13, 2
      %s128 = smul.addr %s127, 8
      %s129 = scalar_lea.vmem %s0, %s128
      %p130 = pneg %p34
      %p131 = pneg %p31
      %p132 = scmp.lt.s32.totalorder %s13, 2
      %s133 = scalar_select %p132, %s13, 2
      %s134 = smul.addr %s133, 8
      %s135 = scalar_lea.vmem %s1, %s134
      %p136 = pneg %p60
      %p137 = pneg %p57
      %p138 = pneg %p86
      %p139 = pneg %p83
      %p140 = scmp.lt.s32.totalorder %s13, 2
      %s141 = scalar_select %p140, %s13, 2
      %s142 = scalar_lea.vmem %s2, %s141
      %p143 = scmp.lt.s32.totalorder %s13, 2
      %s144 = scalar_select %p143, %s13, 2
      %s145 = smul.addr %s144, 8
      %s146 = scalar_lea.vmem %s0, %s145
      %p147 = scmp.lt.s32.totalorder %s13, 2
      %s148 = scalar_select %p147, %s13, 2
      %s149 = smul.addr %s148, 8
      %s150 = scalar_lea.vmem %s1, %s149
      %p151 = scmp.lt.s32.totalorder %s13, 2
      %s152 = scalar_select %p151, %s13, 2
      %s153 = scalar_lea.vmem %s2, %s152
      %v154 = vld [vmem:[%s146] sm:$0xff]
      %v155 = vld [vmem:[%s150] sm:$0xff]
      %vm156 = vcmask 130048
      %v157 = vsel %vm156, %v154, -inf
      %158 = vmax.xlane.f32.xlu0 %v157
      %v159 = vpop.xlane.xlu0 %158
      %v160 = vlaneseq
      %v161 = vand.u32 %v160, 127
      %162 = vset.pattern.permute.xlu0 0
      %163 = vperm.xlu0 %162, %v155
      %v164 = vpop.permute.xlu0 %163
      %vm165 = vcmp.eq.s32.totalorder %v161, %v164
      %v166 = vsel %vm165, %v154, 0.0
      %v167 = vsel %vm156, %v166, 0.0
      %168 = vadd.xlane.f32.xlu0 %v167
      %v169 = vpop.xlane.xlu0 %168
      %v170 = vsub.f32 %v154, %v159
      %v171 = vmul.f32 %v170, 1.442695
      %v172 = vpow.pop %v171
      %v173 = vsel %vm156, %v172, 0.0
      %174 = vadd.xlane.f32.xlu0 %v173
      %v175 = vpop.xlane.xlu0 %174
      %v176 = vsub.f32 %v169, %v159
      %v177 = vlog2.pop %v175
      %v178 = vmul.f32 %v177, 0.6931472
      %v179 = vsub.f32 %v176, %v178
      %v180 = vmul.f32 %v179, 1.442695
      %v181 = vpow.pop %v180
      %v182 = vsub.f32 1.0, %v181
      %v183 = vmax.f32 %v182, 0.0
      %v184 = vmul.f32 %v183, %v183
      %v185 = vmul.f32 %v184, %v179
      %v186 = vlaneseq
      %v187 = vshrl.u32 %v186, 7
      %s188 = smul.u32 %s13, 8
      %v189 = vstv %s188
      %v190 = vadd.s32 %v187, %v189
      %vm191 = vcmp.lt.s32.totalorder %v190, 20
      %v192 = vsel %vm191, %v185, 0.0
      %v193 = vrot.slane %v192, 4
      %v194 = vadd.f32 %v192, %v193
      %v195 = vrot.slane %v194, 2
      %v196 = vadd.f32 %v194, %v195
      %v197 = vrot.slane %v196, 1
      %v198 = vadd.f32 %v196, %v197
      %v199 = vmul.f32 %v198, -0.05
      %vm200 = vcmask 0
      %201 = vst.msk [vmem:[%s153] sm:$0x1] %vm200, %v199
      %p202 = scmp.lt.s32.totalorder %s13, 2
      %s203 = scalar_select %p202, %s13, 2
      %s204 = scalar_lea.vmem %s2, %s203
      // Predicated region
      $region29: #{tpu_custom_call.1} parent=27 // pred_check
        %p205 = pneg %p83
      $region30: #{tpu_custom_call.1} parent=27 // pred_check_branch
        %207 = sbr.rel (%p205) target = $region32
      $region31: #{tpu_custom_call.1} parent=27 // pred_region
        _
      $region32: #{tpu_custom_call.1} parent=27 // pred_fallthru
        _
    $region28: #{tpu_custom_call.1} parent=5 // pred_fallthru
      _
    %p208 = scmp.le.s32.totalorder 2, %s8
    // Predicated region
    $region33: #{tpu_custom_call.1} parent=5 // pred_check
      %p209 = pneg %p208
    $region34: #{tpu_custom_call.1} parent=5 // pred_check_branch
      %211 = sbr.rel (%p209) target = $region36
    $region35: #{tpu_custom_call.1} parent=5 // pred_region
      %s212 = ssub.s32 %s8, 2
      // Predicated region
      $region37: #{tpu_custom_call.1} parent=35 // pred_check
        %p213 = pneg %p89
      $region38: #{tpu_custom_call.1} parent=35 // pred_check_branch
        %215 = sbr.rel (%p213) target = $region40
      $region39: #{tpu_custom_call.1} parent=35 // pred_region
        %p216 = scmp.lt.s32.totalorder %s14, 2
        %s217 = scalar_select %p216, %s14, 2
        %s218 = scalar_lea.vmem %s2, %s217
      $region40: #{tpu_custom_call.1} parent=35 // pred_fallthru
        _
    $region36: #{tpu_custom_call.1} parent=5 // pred_fallthru
      _
  $region6: #{tpu_custom_call.1} parent=0 // loop_footer
    %s12 = sadd.s32 1, %s8
  $region7: #{tpu_custom_call.1} parent=0 // loop_footer_branch
    %7 = sbr.rel target = $region3
  $region8: #{tpu_custom_call.1} parent=0 // loop_exit
    _

</llo_original>
